<compile_context>
chip_gen: v7x
topology: tpu7x:2x2x1
jax: 0.10.0
libtpu: 0.0.40
codegen_flags: <defaults>
</compile_context>

<pallas_src>
import jax
import jax.numpy as jnp
from jax.experimental import pallas as pl
from jax.experimental.pallas import tpu as pltpu


def _sgm_kernel(x1_ref, x2_ref, w_ref, o_ref):
    # Blocks: x1_ref / x2_ref / o_ref are (n_tile, C, t_hw); w_ref is (C, C).
    # Unroll over the (small, static) batch tile so each iteration is one
    # clean (C, C) x (C, t_hw) MXU matmul with no in-kernel transposes.
    n_tile = x2_ref.shape[0]
    for b in range(n_tile):
        logits = jnp.dot(
            w_ref[...], x2_ref[b], preferred_element_type=jnp.float32
        )
        # sigmoid(x) = 1 / (1 + exp(-x)): EUP exp + EUP approx reciprocal.
        gate = pl.reciprocal(1.0 + jnp.exp(-logits), approx=True)
        o_ref[b] = (x1_ref[b].astype(jnp.float32) * gate).astype(o_ref.dtype)


def _vmem_capacity_bytes():
    """Physical per-core VMEM, with a conservative (v7x-sized) fallback."""
    try:
        cap = getattr(pltpu.get_tpu_info(), "vmem_capacity_bytes", None)
        if cap:
            return int(cap)
    except Exception:
        pass
    return 64 << 20


def _round_up(x, m):
    return ((x + m - 1) // m) * m


def _pick_tiles(n, c, hw_padded, itemsize, budget_bytes,
                *, lane_cap=8192, batch_cap=16):
    """Pick (batch_tile, lane_tile) for (n_tile, C, t_hw) blocks.

    Budget accounting: 2 activation inputs + 1 output, each double-buffered
    (6 live activation tiles), plus one resident single-buffered (C, C) weight.
    """
    avail = max(budget_bytes - c * c * itemsize, 6 * c * 128 * itemsize)
    bytes_per_lane = 6 * c * itemsize
    t_hw = min(lane_cap, avail // bytes_per_lane, hw_padded)
    t_hw = max(128, (t_hw // 128) * 128)
    t_hw = min(t_hw, hw_padded)

    n_tile = 1
    if t_hw >= hw_padded:
        # Whole spatial extent fits in one lane tile: block the batch axis so
        # each grid step still moves a large slab of data.
        n_tile = int(avail // (bytes_per_lane * hw_padded))
        n_tile = max(1, min(n_tile, n, batch_cap))
        if n_tile >= n and n >= 2:
            # Keep >= 2 grid steps so both v7x TensorCores have work.
            n_tile = (n + 1) // 2
    return n_tile, t_hw


def saliency_guided_modulation(x1, x2, weight):
    """x1, x2: (N, C, H, W); weight: (C_out, C_in) squeezed 1x1-conv weight."""
    N, C, H, W = x1.shape
    assert x2.shape == x1.shape
    assert weight.shape == (C, C)
    HW = H * W

    # Match the weight dtype to the activations (no VPU promotion of the x2
    # tile; bf16 activations halve HBM traffic).  Accumulation stays f32.
    weight = weight.astype(x1.dtype)
    itemsize = jnp.dtype(x1.dtype).itemsize

    # NCHW -> (N, C, H*W): contiguous reshape, no data movement.
    x1_f = x1.reshape(N, C, HW)
    x2_f = x2.reshape(N, C, HW)

    # Lane-dense output: pad the spatial axis to a multiple of 128 so all
    # stores are full-width (masked partial stores are the largest measured
    # write-path penalty).  Padded lanes are sliced off afterwards.
    hw_padded = max(128, _round_up(HW, 128))
    pad = hw_padded - HW
    if pad:
        x1_f = jnp.pad(x1_f, ((0, 0), (0, 0), (0, pad)))
        x2_f = jnp.pad(x2_f, ((0, 0), (0, 0), (0, pad)))

    # Generation-aware VMEM budget: ~half of physical VMEM.
    vmem_cap = _vmem_capacity_bytes()
    budget = vmem_cap // 2
    vmem_limit = int(min(vmem_cap - (8 << 20), budget + (16 << 20)))

    n_tile, t_hw = _pick_tiles(N, C, hw_padded, itemsize, budget)
    grid = (pl.cdiv(N, n_tile), pl.cdiv(hw_padded, t_hw))

    act_spec = pl.BlockSpec((n_tile, C, t_hw), lambda n, j: (n, 0, j))
    # Constant index map -> single-buffered resident weight (saves one C*C
    # VMEM buffer, which matters on v7x's 64 MiB VMEM at large C).
    w_spec = pl.BlockSpec(
        (C, C), lambda n, j: (0, 0), pipeline_mode=pl.Buffered(1)
    )

    out_flat = pl.pallas_call(
        _sgm_kernel,
        out_shape=jax.ShapeDtypeStruct((N, C, hw_padded), x1.dtype),
        grid_spec=pltpu.PrefetchScalarGridSpec(
            num_scalar_prefetch=0,
            grid=grid,
            in_specs=[
                act_spec,  # x1 (modulated RGB features)
                act_spec,  # x2 (saliency features)
                w_spec,    # 1x1-conv weight, resident
            ],
            out_specs=pl.BlockSpec((n_tile, C, t_hw), lambda n, j: (n, 0, j)),
        ),
        compiler_params=pltpu.CompilerParams(
            dimension_semantics=("parallel", "parallel"),
            vmem_limit_bytes=vmem_limit,
        ),
        cost_estimate=pl.CostEstimate(
            flops=2 * N * HW * C * C,
            transcendentals=2 * N * C * HW,  # exp + reciprocal per element
            bytes_accessed=3 * N * C * HW * itemsize + C * C * itemsize,
        ),
    )(x1_f, x2_f, weight)

    out = out_flat[:, :, :HW] if pad else out_flat
    return out.reshape(N, C, H, W)


def _reference(x1, x2, weight):
    # Pure-JAX f32 reference of the PyTorch forward (1x1 conv, no bias,
    # sigmoid, elementwise multiply).
    gate_logits = jnp.einsum(
        "nchw,oc->nohw", x2.astype(jnp.float32), weight.astype(jnp.float32)
    )
    return x1.astype(jnp.float32) * jax.nn.sigmoid(gate_logits)


if __name__ == "__main__":
    key = jax.random.PRNGKey(0)
    k1, k2, kw = jax.random.split(key, 3)

    # Small shapes consistent with the module (channel_size scaled down);
    # H*W = 256 keeps the lane axis 128-aligned with no padding.
    N, C, H, W = 2, 32, 16, 16
    x1 = jax.random.normal(k1, (N, C, H, W), dtype=jnp.float32)
    x2 = jax.random.normal(k2, (N, C, H, W), dtype=jnp.float32)
    weight = jax.random.normal(kw, (C, C), dtype=jnp.float32) * (1.0 / jnp.sqrt(C))

    out = jax.block_until_ready(saliency_guided_modulation(x1, x2, weight))
    ref = _reference(x1, x2, weight)
    assert out.shape == (N, C, H, W)
    # Tolerance reflects the approx EUP reciprocal in the fused sigmoid.
    assert jnp.allclose(out, ref, atol=3e-2, rtol=3e-2), "f32 mismatch vs reference"

    # Non-128-aligned spatial extent: exercises the lane-dense pad-then-slice
    # path plus batch blocking.
    N2, C2, H2, W2 = 2, 4, 5, 5
    y1 = jax.random.normal(k1, (N2, C2, H2, W2), dtype=jnp.float32)
    y2 = jax.random.normal(k2, (N2, C2, H2, W2), dtype=jnp.float32)
    w2 = jax.random.normal(kw, (C2, C2), dtype=jnp.float32) * (1.0 / jnp.sqrt(C2))
    out2 = jax.block_until_ready(saliency_guided_modulation(y1, y2, w2))
    assert jnp.allclose(out2, _reference(y1, y2, w2), atol=3e-2, rtol=3e-2), \
        "padded-HW mismatch vs reference"

    # bf16 activation path (recommended model-level dtype; halves HBM traffic).
    x1b, x2b = x1.astype(jnp.bfloat16), x2.astype(jnp.bfloat16)
    outb = jax.block_until_ready(saliency_guided_modulation(x1b, x2b, weight))
    refb = _reference(x1b, x2b, weight)
    assert jnp.allclose(outb.astype(jnp.float32), refb, atol=6e-2, rtol=6e-2), \
        "bf16 mismatch vs reference"

    print("KERNEL_OK")
</pallas_src>

<mosaic_0001>
module attributes {stable_mosaic.version = 11 : i64} {
  func.func @_sgm_kernel(%arg0: i32, %arg1: i32, %arg2: memref<1x32x256xf32, #tpu.memory_space<vmem>>, %arg3: memref<1x32x256xf32, #tpu.memory_space<vmem>>, %arg4: memref<32x32xf32, #tpu.memory_space<vmem>>, %arg5: memref<1x32x256xf32, #tpu.memory_space<vmem>>) attributes {dimension_semantics = [#tpu.dimension_semantics<parallel>, #tpu.dimension_semantics<parallel>], iteration_bounds = array<i64: 2, 1>, scalar_prefetch = 0 : i64, scratch_operands = 0 : i64, tpu.core_type = #tpu.core_type<tc>, window_params = [{transform_indices = @transform_0, window_bounds = array<i64: 1, 32, 256>}, {transform_indices = @transform_1, window_bounds = array<i64: 1, 32, 256>}, {pipeline_mode = #tpu.pipeline_mode<synchronous>, transform_indices = @transform_2, window_bounds = array<i64: 32, 32>}, {transform_indices = @transform_3, window_bounds = array<i64: 1, 32, 256>}]} {
    %c0 = arith.constant 0 : index
    %c0_0 = arith.constant 0 : index
    %0 = vector.load %arg4[%c0, %c0_0] : memref<32x32xf32, #tpu.memory_space<vmem>>, vector<32x32xf32>
    %c0_1 = arith.constant 0 : index
    %c0_2 = arith.constant 0 : index
    %c0_3 = arith.constant 0 : index
    %1 = vector.load %arg3[%c0_1, %c0_2, %c0_3] : memref<1x32x256xf32, #tpu.memory_space<vmem>>, vector<1x32x256xf32>
    %2 = vector.shape_cast %1 : vector<1x32x256xf32> to vector<32x256xf32>
    %cst = arith.constant dense<0.000000e+00> : vector<32x256xf32>
    %3 = tpu.matmul %0, %2, %cst {dimension_numbers = #tpu.dot_dimension_numbers<[1], [0], [0], [1], [0, 0, 1, 1], [], []>} : vector<32x32xf32>, vector<32x256xf32>, vector<32x256xf32> -> vector<32x256xf32>
    %cst_4 = arith.constant 0.000000e+00 : f32
    %4 = vector.broadcast %cst_4 : f32 to vector<32x256xf32>
    %5 = arith.subf %4, %3 : vector<32x256xf32>
    %6 = math.exp %5 : vector<32x256xf32>
    %cst_5 = arith.constant 1.000000e+00 : f32
    %7 = vector.broadcast %cst_5 : f32 to vector<32x256xf32>
    %8 = arith.addf %7, %6 : vector<32x256xf32>
    %9 = tpu.reciprocal %8 {approx = true} : vector<32x256xf32> -> vector<32x256xf32>
    %c0_6 = arith.constant 0 : index
    %c0_7 = arith.constant 0 : index
    %c0_8 = arith.constant 0 : index
    %10 = vector.load %arg2[%c0_6, %c0_7, %c0_8] : memref<1x32x256xf32, #tpu.memory_space<vmem>>, vector<1x32x256xf32>
    %11 = vector.shape_cast %10 : vector<1x32x256xf32> to vector<32x256xf32>
    %12 = arith.mulf %11, %9 : vector<32x256xf32>
    %c0_9 = arith.constant 0 : index
    %c0_10 = arith.constant 0 : index
    %c0_11 = arith.constant 0 : index
    %13 = vector.load %arg5[%c0_9, %c0_10, %c0_11] : memref<1x32x256xf32, #tpu.memory_space<vmem>>, vector<1x32x256xf32>
    %14 = vector.shape_cast %13 : vector<1x32x256xf32> to vector<32x256xf32>
    %15 = vector.shape_cast %12 : vector<32x256xf32> to vector<1x32x256xf32>
    tpu.vector_store %arg5[%c0_9, %c0_10, %c0_11], %15 {strides = array<i32>} : memref<1x32x256xf32, #tpu.memory_space<vmem>>, vector<1x32x256xf32>,
    return
  }
  func.func @transform_0(%arg0: i32, %arg1: i32) -> (i32, i32, i32) {
    %c0_i32 = arith.constant 0 : i32
    %c0_i32_0 = arith.constant 0 : i32
    return %arg0, %c0_i32, %arg1 : i32, i32, i32
  }
  func.func @transform_1(%arg0: i32, %arg1: i32) -> (i32, i32, i32) {
    %c0_i32 = arith.constant 0 : i32
    %c0_i32_0 = arith.constant 0 : i32
    return %arg0, %c0_i32, %arg1 : i32, i32, i32
  }
  func.func @transform_2(%arg0: i32, %arg1: i32) -> (i32, i32) {
    %c0_i32 = arith.constant 0 : i32
    %c0_i32_0 = arith.constant 0 : i32
    %c0_i32_1 = arith.constant 0 : i32
    return %c0_i32, %c0_i32_0 : i32, i32
  }
  func.func @transform_3(%arg0: i32, %arg1: i32) -> (i32, i32, i32) {
    %c0_i32 = arith.constant 0 : i32
    %c0_i32_0 = arith.constant 0 : i32
    return %arg0, %c0_i32, %arg1 : i32, i32, i32
  }
}

</mosaic_0001>

<llo_original>
// kernel: tpu_custom_call.1
$region0: #{tpu_custom_call.1}
  #allocation0 [shape = 'u32[]', space=smem, size = 0x4, offset = 0x4, fixed_abs, tag = 'smem constant byte address 0x4 - core index']
  #allocation1 [shape = 'u32[144,128]{1,0:T(1,128)}', space=vmem, size = 0x12000, scoped, tag = 'internal scratch']
  %s0 = inlined_call_operand.hbm [shape: f32[2,32,256], index: 0, kind: input, shape index: {}]
  %s1 = inlined_call_operand.hbm [shape: f32[2,32,256], index: 1, kind: input, shape index: {}]
  %s2 = inlined_call_operand.hbm [shape: f32[32,32], index: 2, kind: input, shape index: {}]
  %s3 = inlined_call_operand.hbm [shape: f32[2,32,256], index: 3, kind: output, shape index: {}]
  %s4 = sld [smem:[#allocation0]]
  $region57: #{tpu_custom_call.1} parent=0
    _
  %s6 = ssub.s32 1, %s4
  %s7 = scalar_select 0, %s6, %s4
  $region1: #{tpu_custom_call.1} parent=0
    #allocation2 [shape = 'u8[65536]{0}', space=vmem, size = 0x10000, scoped, tag = 'input window, operand 0']
    #allocation3 [shape = 's32[2]{0}', space=sflag, size = 0x8, scoped, tag = 'scoped memory for tpu_custom_call.1']
    #allocation4 [shape = 's32[2]{0}', space=sflag, size = 0x8, scoped, tag = 'scoped memory for tpu_custom_call.1']
    #allocation5 [shape = 'u8[65536]{0}', space=vmem, size = 0x10000, scoped, tag = 'input window, operand 1']
    #allocation6 [shape = 's32[2]{0}', space=sflag, size = 0x8, scoped, tag = 'scoped memory for tpu_custom_call.1']
    #allocation7 [shape = 'u8[16384]{0}', space=vmem, size = 0x4000, scoped, tag = 'input window, operand 2, single buffered']
    #allocation8 [shape = 'u8[65536]{0}', space=vmem, size = 0x10000, scoped, tag = 'output window, operand 0']
    %8 = vsyncpa [#allocation3], 0
    %s9 = scalar_lea.sflag [#allocation3], 1
    %10 = vsyncpa %s9, 0
    %11 = vsyncpa [#allocation6], 0
    %s12 = scalar_lea.sflag [#allocation6], 1
    %13 = vsyncpa %s12, 0
    %14 = vsyncpa [#allocation4], 0
    %s15 = scalar_lea.sflag [#allocation4], 1
    %16 = vsyncpa %s15, 0
    loop: start=0, step=1, limit=4
    $region2: #{tpu_custom_call.1} parent=1 // loop_pre_header
      _
    $region3: #{tpu_custom_call.1} parent=1 // loop_header
      %s18 = sphi 0, %s22
      %p19 = scmp.ge.s32.totalorder %s18, 4
      %s25 = sphi 0, %s37
      %s26 = sphi 0, %s33
      %s27 = sphi 0, %s25
      %s28 = sphi 0, %s26
      %s29 = sphi 0, %s27
      %s30 = sphi 0, %s28
      %s42 = sphi 0, %s44
      %s45 = sphi 0, %s42
      %s46 = sphi 0, %s45
      %s62 = sphi 0, %s46
      %s70 = sphi 0, %s72
      %s73 = sphi 0, %s70
      %s74 = sphi 0, %s73
      %s90 = sphi 0, %s74
      %s94 = sphi 0, %s94
      %s96 = sphi 0, %s94
      %s97 = sphi 0, %s96
      %s111 = sphi 0, %s97
      %s119 = sphi 0, %s121
      %s122 = sphi 0, %s119
      %s123 = sphi 0, %s122
      %s139 = sphi 0, %s123
    $region4: #{tpu_custom_call.1} parent=1 // loop_header_branch
      %21 = sbr.rel (%p19) target = $region8
    $region5: #{tpu_custom_call.1} parent=1 // loop_body
      %s23 = ssub.s32 %s18, 1
      %s24 = ssub.s32 %s18, 2
      %s31 = sadd.s32 1, %s26
      %p32 = scmp.ge.s32.totalorder %s31, 1
      %s33 = scalar_select %p32, 0, %s31
      %s34 = sadd.s32 1, %s25
      %s35 = scalar_select %p32, %s34, %s25
      %p36 = scmp.ge.s32.totalorder %s35, 2
      %s37 = scalar_select %p36, 0, %s35
      %s38 = ssub.s32 %s25, %s37
      %s39 = ssub.s32 %s26, %s33
      %s40 = sor.u32 %s38, %s39
      %p41 = scmp.eq.s32.totalorder %s40, 0
      %s43 = sadd.s32 %s42, 1
      %s44 = scalar_select %p41, %s42, %s43
      %p47 = pneg %p41
      %p48 = scmp.eq.s32.totalorder %s18, 1
      %p49 = por %p47, %p48
      %p50 = scmp.ne.s32.totalorder %s42, %s45
      %p51 = scmp.eq.s32.totalorder %s18, 0
      %p52 = por %p50, %p51
      %p53 = scmp.ne.s32.totalorder %s42, %s45
      %p54 = scmp.eq.s32.totalorder %s23, 1
      %p55 = por %p53, %p54
      %p56 = scmp.ne.s32.totalorder %s45, %s46
      %p57 = scmp.eq.s32.totalorder %s23, 0
      %p58 = por %p56, %p57
      %p59 = scmp.ne.s32.totalorder %s45, %s46
      %p60 = scmp.eq.s32.totalorder %s24, 1
      %p61 = por %p59, %p60
      %p63 = scmp.ne.s32.totalorder %s46, %s62
      %p64 = scmp.eq.s32.totalorder %s24, 0
      %p65 = por %p63, %p64
      %s66 = ssub.s32 %s25, %s37
      %s67 = ssub.s32 %s26, %s33
      %s68 = sor.u32 %s66, %s67
      %p69 = scmp.eq.s32.totalorder %s68, 0
      %s71 = sadd.s32 %s70, 1
      %s72 = scalar_select %p69, %s70, %s71
      %p75 = pneg %p69
      %p76 = scmp.eq.s32.totalorder %s18, 1
      %p77 = por %p75, %p76
      %p78 = scmp.ne.s32.totalorder %s70, %s73
      %p79 = scmp.eq.s32.totalorder %s18, 0
      %p80 = por %p78, %p79
      %p81 = scmp.ne.s32.totalorder %s70, %s73
      %p82 = scmp.eq.s32.totalorder %s23, 1
      %p83 = por %p81, %p82
      %p84 = scmp.ne.s32.totalorder %s73, %s74
      %p85 = scmp.eq.s32.totalorder %s23, 0
      %p86 = por %p84, %p85
      %p87 = scmp.ne.s32.totalorder %s73, %s74
      %p88 = scmp.eq.s32.totalorder %s24, 1
      %p89 = por %p87, %p88
      %p91 = scmp.ne.s32.totalorder %s74, %s90
      %p92 = scmp.eq.s32.totalorder %s24, 0
      %p93 = por %p91, %p92
      %s95 = sadd.s32 %s94, 1
      %p98 = scmp.eq.s32.totalorder %s18, 1
      %p99 = scmp.ne.s32.totalorder %s94, %s96
      %p100 = scmp.eq.s32.totalorder %s18, 0
      %p101 = por %p99, %p100
      %p102 = scmp.ne.s32.totalorder %s94, %s96
      %p103 = scmp.eq.s32.totalorder %s23, 1
      %p104 = por %p102, %p103
      %p105 = scmp.ne.s32.totalorder %s96, %s97
      %p106 = scmp.eq.s32.totalorder %s23, 0
      %p107 = por %p105, %p106
      %p108 = scmp.ne.s32.totalorder %s96, %s97
      %p109 = scmp.eq.s32.totalorder %s24, 1
      %p110 = por %p108, %p109
      %p112 = scmp.ne.s32.totalorder %s97, %s111
      %p113 = scmp.eq.s32.totalorder %s24, 0
      %p114 = por %p112, %p113
      %s115 = ssub.s32 %s25, %s37
      %s116 = ssub.s32 %s26, %s33
      %s117 = sor.u32 %s115, %s116
      %p118 = scmp.eq.s32.totalorder %s117, 0
      %s120 = sadd.s32 %s119, 1
      %s121 = scalar_select %p118, %s119, %s120
      %p124 = pneg %p118
      %p125 = scmp.eq.s32.totalorder %s18, 1
      %p126 = por %p124, %p125
      %p127 = scmp.ne.s32.totalorder %s119, %s122
      %p128 = scmp.eq.s32.totalorder %s18, 0
      %p129 = por %p127, %p128
      %p130 = scmp.ne.s32.totalorder %s119, %s122
      %p131 = scmp.eq.s32.totalorder %s23, 1
      %p132 = por %p130, %p131
      %p133 = scmp.ne.s32.totalorder %s122, %s123
      %p134 = scmp.eq.s32.totalorder %s23, 0
      %p135 = por %p133, %p134
      %p136 = scmp.ne.s32.totalorder %s122, %s123
      %p137 = scmp.eq.s32.totalorder %s24, 1
      %p138 = por %p136, %p137
      %p140 = scmp.ne.s32.totalorder %s123, %s139
      %p141 = scmp.eq.s32.totalorder %s24, 0
      %p142 = por %p140, %p141
      %p143 = scmp.le.s32.totalorder 1, %s18
      %p144 = scmp.lt.s32.totalorder %s18, 3
      %p145 = pnand %p143, %p144
      %p146 = pneg %p145
      // Predicated region
      $region9: #{tpu_custom_call.1} parent=5 // pred_check
        _
      $region10: #{tpu_custom_call.1} parent=5 // pred_check_branch
        %148 = sbr.rel (%p145) target = $region12
      $region11: #{tpu_custom_call.1} parent=5 // pred_region
        %s149 = ssub.s32 %s18, 1
        // Predicated region
        $region13: #{tpu_custom_call.1} parent=11 // pred_check
          %p150 = pneg %p107
        $region14: #{tpu_custom_call.1} parent=11 // pred_check_branch
          %152 = sbr.rel (%p150) target = $region16
        $region15: #{tpu_custom_call.1} parent=11 // pred_region
          %s154 = ssub.s32 512, 512
          %155 = vsyncadd [#allocation6], %s154
          %s156 = sshll.u32 [#allocation7], 4
          %s157 = int_to_ptr.vmem [resolvable:$true] %s156
          %162 = dma.hbm_to_vmem [thread:$0]  %s2, 512, %s157, [#allocation6], 128, 128, 8
        $region16: #{tpu_custom_call.1} parent=11 // pred_fallthru
          _
      $region12: #{tpu_custom_call.1} parent=5 // pred_fallthru
        _
      %p163 = scmp.lt.s32.totalorder %s18, 2
      // Predicated region
      $region17: #{tpu_custom_call.1} parent=5 // pred_check
        %p164 = pneg %p163
      $region18: #{tpu_custom_call.1} parent=5 // pred_check_branch
        %166 = sbr.rel (%p164) target = $region20
      $region19: #{tpu_custom_call.1} parent=5 // pred_region
        // Predicated region
        $region21: #{tpu_custom_call.1} parent=19 // pred_check
          %p167 = pneg %p52
        $region22: #{tpu_custom_call.1} parent=19 // pred_check_branch
          %169 = sbr.rel (%p167) target = $region24
        $region23: #{tpu_custom_call.1} parent=19 // pred_region
          %s170 = sand.u32 %s42, 1
          %s171 = scalar_lea.sflag [#allocation3], %s170
          %s172 = sand.u32 %s42, 1
          %s173 = smul.addr %s172, 64
          %s174 = scalar_lea.vmem [#allocation2], %s173
          %s175 = smul.u32 2, %s26
          %s177 = ssub.s32 1024, 1024
          %178 = vsyncadd %s171, %s177
          %s179 = smul.addr %s25, 8
          %s180 = sadd.s32 %s175, %s179
          %s181 = smul.addr %s180, 128
          %s182 = scalar_lea.hbm %s0, %s181
          %s183 = sshll.u32 %s174, 4
          %s184 = int_to_ptr.vmem [resolvable:$true] %s183
          %189 = dma.hbm_to_vmem [thread:$0]  %s182, 1024, %s184, %s171, 256, 256, 16
        $region24: #{tpu_custom_call.1} parent=19 // pred_fallthru
          _
        // Predicated region
        $region25: #{tpu_custom_call.1} parent=19 // pred_check
          %p190 = pneg %p80
        $region26: #{tpu_custom_call.1} parent=19 // pred_check_branch
          %192 = sbr.rel (%p190) target = $region28
        $region27: #{tpu_custom_call.1} parent=19 // pred_region
          %s193 = sand.u32 %s18, 1
          %s194 = scalar_lea.sflag [#allocation6], %s193
          %s195 = sand.u32 %s70, 1
          %s196 = smul.addr %s195, 64
          %s197 = scalar_lea.vmem [#allocation5], %s196
          %s198 = smul.u32 2, %s26
          %s200 = ssub.s32 1024, 1024
          %201 = vsyncadd %s194, %s200
          %s202 = smul.addr %s25, 8
          %s203 = sadd.s32 %s198, %s202
          %s204 = smul.addr %s203, 128
          %s205 = scalar_lea.hbm %s1, %s204
          %s206 = sshll.u32 %s197, 4
          %s207 = int_to_ptr.vmem [resolvable:$true] %s206
          %212 = dma.hbm_to_vmem [thread:$0]  %s205, 1024, %s207, %s194, 256, 256, 16
        $region28: #{tpu_custom_call.1} parent=19 // pred_fallthru
          _
      $region20: #{tpu_custom_call.1} parent=5 // pred_fallthru
        _
      %p213 = scmp.le.s32.totalorder 1, %s18
      %p214 = scmp.lt.s32.totalorder %s18, 3
      %p215 = pnand %p213, %p214
      %p216 = pneg %p215
      // Predicated region
      $region29: #{tpu_custom_call.1} parent=5 // pred_check
        _
      $region30: #{tpu_custom_call.1} parent=5 // pred_check_branch
        %218 = sbr.rel (%p215) target = $region32
      $region31: #{tpu_custom_call.1} parent=5 // pred_region
        %s219 = ssub.s32 %s18, 1
        %s220 = sand.u32 %s45, 1
        %s221 = scalar_lea.sflag [#allocation3], %s220
        %s222 = sand.u32 %s45, 1
        %s223 = smul.addr %s222, 64
        %s224 = scalar_lea.vmem [#allocation2], %s223
        // Predicated region
        $region33: #{tpu_custom_call.1} parent=31 // pred_check
          %p225 = pneg %p58
        $region34: #{tpu_custom_call.1} parent=31 // pred_check_branch
          %227 = sbr.rel (%p225) target = $region36
        $region35: #{tpu_custom_call.1} parent=31 // pred_region
          %228 = dma.done %s221, 1024
        $region36: #{tpu_custom_call.1} parent=31 // pred_fallthru
          _
        %s229 = sand.u32 %s23, 1
        %s230 = scalar_lea.sflag [#allocation6], %s229
        %s231 = sand.u32 %s73, 1
        %s232 = smul.addr %s231, 64
        %s233 = scalar_lea.vmem [#allocation5], %s232
        // Predicated region
        $region37: #{tpu_custom_call.1} parent=31 // pred_check
          %p234 = pneg %p86
        $region38: #{tpu_custom_call.1} parent=31 // pred_check_branch
          %236 = sbr.rel (%p234) target = $region40
        $region39: #{tpu_custom_call.1} parent=31 // pred_region
          %237 = dma.done %s230, 1024
        $region40: #{tpu_custom_call.1} parent=31 // pred_fallthru
          _
        // Predicated region
        $region41: #{tpu_custom_call.1} parent=31 // pred_check
          %p238 = pneg %p107
        $region42: #{tpu_custom_call.1} parent=31 // pred_check_branch
          %240 = sbr.rel (%p238) target = $region44
        $region43: #{tpu_custom_call.1} parent=31 // pred_region
          %241 = dma.done [#allocation6], 512
        $region44: #{tpu_custom_call.1} parent=31 // pred_fallthru
          _
        %s242 = sand.u32 %s45, 1
        %s243 = scalar_lea.sflag [#allocation3], %s242
        %s244 = sand.u32 %s45, 1
        %s245 = smul.addr %s244, 64
        %s246 = scalar_lea.vmem [#allocation2], %s245
        %p247 = pneg %p58
        %p248 = pneg %p55
        %s249 = sand.u32 %s23, 1
        %s250 = scalar_lea.sflag [#allocation6], %s249
        %s251 = sand.u32 %s73, 1
        %s252 = smul.addr %s251, 64
        %s253 = scalar_lea.vmem [#allocation5], %s252
        %p254 = pneg %p86
        %p255 = pneg %p83
        %p256 = pneg %p107
        %p257 = pneg %p104
        %p258 = pneg %p135
        %p259 = pneg %p132
        %s260 = sand.u32 %s122, 1
        %s261 = scalar_lea.sflag [#allocation4], %s260
        %s262 = sand.u32 %s122, 1
        %s263 = smul.addr %s262, 64
        %s264 = scalar_lea.vmem [#allocation8], %s263
        %s265 = smul.u32 2, %s28
        %s266 = smul.u32 2, %s28
        %s267 = smul.u32 2, %s28
        %v268 = vld [vmem:[#allocation7] sm:$0xff]
        %v269 = vld [vmem:[#allocation7 + $0x8] sm:$0xff]
        %v270 = vld [vmem:[#allocation7 + $0x10] sm:$0xff]
        %v271 = vld [vmem:[#allocation7 + $0x18] sm:$0xff]
        %v272 = vld [vmem:[%s233] sm:$0xff]
        %v273 = vld [vmem:[%s233 + $0x8] sm:$0xff]
        %v274 = vld [vmem:[%s233 + $0x10] sm:$0xff]
        %v275 = vld [vmem:[%s233 + $0x18] sm:$0xff]
        %v276 = vld [vmem:[%s233 + $0x20] sm:$0xff]
        %v277 = vld [vmem:[%s233 + $0x28] sm:$0xff]
        %v278 = vld [vmem:[%s233 + $0x30] sm:$0xff]
        %v279 = vld [vmem:[%s233 + $0x38] sm:$0xff]
        %vm280 = vcmask 261120
        %v282 = vsel %vm280, %v268, 0
        %v285 = vsel %vm280, %v269, 0
        %v288 = vsel %vm280, %v270, 0
        %v291 = vsel %vm280, %v271, 0
        %293 = vmatprep.subr.mxu0 %v273
        %294 = vmatpush1.msra.mxu0 %v272
        %295 = vmatprep.subr.mxu0 %v275
        %296 = vmatpush1.msra.mxu0 %v274
        %297 = vmatprep.subr.mxu0 %v277
        %298 = vmatpush1.msra.mxu0 %v276
        %299 = vmatprep.subr.mxu0 %v279
        %300 = vmatpush1.msra.mxu0 %v278
        %301 = vmatprep.subr.mxu0 0.0
        %302 = vmatpush1.msra.mxu0 0.0
        %303 = vmatprep.subr.mxu0 0.0
        %304 = vmatpush1.msra.mxu0 0.0
        %305 = vmatprep.subr.mxu0 0.0
        %306 = vmatpush1.msra.mxu0 0.0
        %307 = vmatprep.subr.mxu0 0.0
        %308 = vmatpush1.msra.mxu0 0.0
        %309 = vmatprep.subr.mxu0 0.0
        %310 = vmatpush1.msra.mxu0 0.0
        %311 = vmatprep.subr.mxu0 0.0
        %312 = vmatpush1.msra.mxu0 0.0
        %313 = vmatprep.subr.mxu0 0.0
        %314 = vmatpush1.msra.mxu0 0.0
        %315 = vmatprep.subr.mxu0 0.0
        %316 = vmatpush1.msra.mxu0 0.0
        %317 = vmatprep.subr.mxu0 0.0
        %318 = vmatpush1.msra.mxu0 0.0
        %319 = vmatprep.subr.mxu0 0.0
        %320 = vmatpush1.msra.mxu0 0.0
        %321 = vmatprep.subr.mxu0 0.0
        %322 = vmatpush1.msra.mxu0 0.0
        %323 = vmatprep.subr.mxu0 0.0
        %324 = vmatpush1.msra.mxu0 0.0
        %325 = vmatprep.subr.mxu0 0.0
        %326 = vmatpush1.msra.mxu0 0.0
        %327 = vmatprep.subr.mxu0 0.0
        %328 = vmatpush1.msra.mxu0 0.0
        %329 = vmatprep.subr.mxu0 0.0
        %330 = vmatpush1.msra.mxu0 0.0
        %331 = vmatprep.subr.mxu0 0.0
        %332 = vmatpush1.msra.mxu0 0.0
        %333 = vmatprep.subr.mxu0 0.0
        %334 = vmatpush1.msra.mxu0 0.0
        %335 = vmatprep.subr.mxu0 0.0
        %336 = vmatpush1.msra.mxu0 0.0
        %337 = vmatprep.subr.mxu0 0.0
        %338 = vmatpush1.msra.mxu0 0.0
        %339 = vmatprep.subr.mxu0 0.0
        %340 = vmatpush1.msra.mxu0 0.0
        %341 = vmatprep.subr.mxu0 0.0
        %342 = vmatpush1.msra.mxu0 0.0
        %343 = vmatprep.subr.mxu0 0.0
        %344 = vmatpush1.msra.mxu0 0.0
        %345 = vmatprep.subr.mxu0 0.0
        %346 = vmatpush1.msra.mxu0 0.0
        %347 = vmatprep.subr.mxu0 0.0
        %348 = vmatpush1.msra.mxu0 0.0
        %349 = vmatprep.subr.mxu0 0.0
        %350 = vmatpush1.msra.mxu0 0.0
        %351 = vmatprep.subr.mxu0 0.0
        %352 = vmatpush1.msra.mxu0 0.0
        %353 = vmatprep.subr.mxu0 0.0
        %354 = vmatpush1.msra.mxu0 0.0
        %355 = vmatprep.subr.mxu0 0.0
        %356 = vmatpush1.msra.mxu0 0.0
        %357 = vmatprep.mubr.f32.mxu0 0.0
        %358 = vmatmul.mubr.f32.gmra.mrb[0].mxu0 %v282
        %v359 = vpop.f32.mrb[0].mxu0
        %v360 = vadd.f32 0.0, %v359
        %v361 = vpop.f32.mrb[0].mxu0
        %v362 = vadd.f32 0.0, %v361
        %363 = vmatprep.mubr.f32.mxu0 0.0
        %364 = vmatmul.mubr.f32.gmra.mrb[0].mxu0 %v285
        %v365 = vpop.f32.mrb[0].mxu0
        %v366 = vadd.f32 0.0, %v365
        %v367 = vpop.f32.mrb[0].mxu0
        %v368 = vadd.f32 0.0, %v367
        %369 = vmatprep.mubr.f32.mxu0 0.0
        %370 = vmatmul.mubr.f32.gmra.mrb[0].mxu0 %v288
        %v371 = vpop.f32.mrb[0].mxu0
        %v372 = vadd.f32 0.0, %v371
        %v373 = vpop.f32.mrb[0].mxu0
        %v374 = vadd.f32 0.0, %v373
        %375 = vmatprep.mubr.f32.mxu0 0.0
        %376 = vmatmul.mubr.f32.gmra.mrb[0].mxu0 %v291
        %v377 = vpop.f32.mrb[0].mxu0
        %v378 = vadd.f32 0.0, %v377
        %v379 = vpop.f32.mrb[0].mxu0
        %v380 = vadd.f32 0.0, %v379
        %381 = vdwg.mxu0
        %v382 = vsub.f32 0.0, %v360
        %v383 = vsub.f32 0.0, %v362
        %v384 = vsub.f32 0.0, %v366
        %v385 = vsub.f32 0.0, %v368
        %v386 = vsub.f32 0.0, %v372
        %v387 = vsub.f32 0.0, %v374
        %v388 = vsub.f32 0.0, %v378
        %v389 = vsub.f32 0.0, %v380
        %v390 = vmul.f32 %v382, 1.442695
        %v391 = vpow.pop %v390
        %v392 = vmul.f32 %v383, 1.442695
        %v393 = vpow.pop %v392
        %v394 = vmul.f32 %v384, 1.442695
        %v395 = vpow.pop %v394
        %v396 = vmul.f32 %v385, 1.442695
        %v397 = vpow.pop %v396
        %v398 = vmul.f32 %v386, 1.442695
        %v399 = vpow.pop %v398
        %v400 = vmul.f32 %v387, 1.442695
        %v401 = vpow.pop %v400
        %v402 = vmul.f32 %v388, 1.442695
        %v403 = vpow.pop %v402
        %v404 = vmul.f32 %v389, 1.442695
        %v405 = vpow.pop %v404
        %v406 = vadd.f32 %v391, 1.0
        %v407 = vadd.f32 %v393, 1.0
        %v408 = vadd.f32 %v395, 1.0
        %v409 = vadd.f32 %v397, 1.0
        %v410 = vadd.f32 %v399, 1.0
        %v411 = vadd.f32 %v401, 1.0
        %v412 = vadd.f32 %v403, 1.0
        %v413 = vadd.f32 %v405, 1.0
        %v414 = vrcp.pop %v406
        %v415 = vrcp.pop %v407
        %v416 = vrcp.pop %v408
        %v417 = vrcp.pop %v409
        %v418 = vrcp.pop %v410
        %v419 = vrcp.pop %v411
        %v420 = vrcp.pop %v412
        %v421 = vrcp.pop %v413
        %v422 = vld [vmem:[%s224] sm:$0xff]
        %v423 = vld [vmem:[%s224 + $0x8] sm:$0xff]
        %v424 = vld [vmem:[%s224 + $0x10] sm:$0xff]
        %v425 = vld [vmem:[%s224 + $0x18] sm:$0xff]
        %v426 = vld [vmem:[%s224 + $0x20] sm:$0xff]
        %v427 = vld [vmem:[%s224 + $0x28] sm:$0xff]
        %v428 = vld [vmem:[%s224 + $0x30] sm:$0xff]
        %v429 = vld [vmem:[%s224 + $0x38] sm:$0xff]
        %v430 = vmul.f32 %v422, %v414
        %v431 = vmul.f32 %v423, %v415
        %v432 = vmul.f32 %v424, %v416
        %v433 = vmul.f32 %v425, %v417
        %v434 = vmul.f32 %v426, %v418
        %v435 = vmul.f32 %v427, %v419
        %v436 = vmul.f32 %v428, %v420
        %v437 = vmul.f32 %v429, %v421
        %438 = vst [vmem:[%s264] sm:$0xff] %v430
        %439 = vst [vmem:[%s264 + $0x8] sm:$0xff] %v431
        %440 = vst [vmem:[%s264 + $0x10] sm:$0xff] %v432
        %441 = vst [vmem:[%s264 + $0x18] sm:$0xff] %v433
        %442 = vst [vmem:[%s264 + $0x20] sm:$0xff] %v434
        %443 = vst [vmem:[%s264 + $0x28] sm:$0xff] %v435
        %444 = vst [vmem:[%s264 + $0x30] sm:$0xff] %v436
        %445 = vst [vmem:[%s264 + $0x38] sm:$0xff] %v437
        %s446 = sand.u32 %s122, 1
        %s447 = scalar_lea.sflag [#allocation4], %s446
        %s448 = sand.u32 %s122, 1
        %s449 = smul.addr %s448, 64
        %s450 = scalar_lea.vmem [#allocation8], %s449
        // Predicated region
        $region45: #{tpu_custom_call.1} parent=31 // pred_check
          %p451 = pneg %p132
        $region46: #{tpu_custom_call.1} parent=31 // pred_check_branch
          %453 = sbr.rel (%p451) target = $region48
        $region47: #{tpu_custom_call.1} parent=31 // pred_region
          %s454 = smul.u32 2, %s28
          %s456 = ssub.s32 1024, 1024
          %457 = vsyncadd %s447, %s456
          %s458 = smul.addr %s27, 8
          %s459 = sadd.s32 %s454, %s458
          %s460 = smul.addr %s459, 128
          %s461 = scalar_lea.hbm %s3, %s460
          %s462 = sshll.u32 %s450, 4
          %s463 = int_to_ptr.vmem [resolvable:$true] %s462
          %468 = dma.vmem_to_hbm [thread:$0]  %s463, 1024, %s461, %s447, 256, 256, 16
        $region48: #{tpu_custom_call.1} parent=31 // pred_fallthru
          _
      $region32: #{tpu_custom_call.1} parent=5 // pred_fallthru
        _
      %p469 = scmp.le.s32.totalorder 2, %s18
      // Predicated region
      $region49: #{tpu_custom_call.1} parent=5 // pred_check
        %p470 = pneg %p469
      $region50: #{tpu_custom_call.1} parent=5 // pred_check_branch
        %472 = sbr.rel (%p470) target = $region52
      $region51: #{tpu_custom_call.1} parent=5 // pred_region
        %s473 = ssub.s32 %s18, 2
        // Predicated region
        $region53: #{tpu_custom_call.1} parent=51 // pred_check
          %p474 = pneg %p138
        $region54: #{tpu_custom_call.1} parent=51 // pred_check_branch
          %476 = sbr.rel (%p474) target = $region56
        $region55: #{tpu_custom_call.1} parent=51 // pred_region
          %s477 = sand.u32 %s123, 1
          %s478 = scalar_lea.sflag [#allocation4], %s477
          %s479 = sand.u32 %s123, 1
          %s480 = smul.addr %s479, 64
          %s481 = scalar_lea.vmem [#allocation8], %s480
          %482 = dma.done %s478, 1024
        $region56: #{tpu_custom_call.1} parent=51 // pred_fallthru
          _
      $region52: #{tpu_custom_call.1} parent=5 // pred_fallthru
        _
    $region6: #{tpu_custom_call.1} parent=1 // loop_footer
      %s22 = sadd.s32 1, %s18
    $region7: #{tpu_custom_call.1} parent=1 // loop_footer_branch
      %17 = sbr.rel target = $region3
    $region8: #{tpu_custom_call.1} parent=1 // loop_exit
      _
    %483 = vsyncpa [#allocation3], 1
    %s484 = scalar_lea.sflag [#allocation3], 1
    %485 = vsyncpa %s484, 1
    %486 = vsyncpa [#allocation6], 1
    %s487 = scalar_lea.sflag [#allocation6], 1
    %488 = vsyncpa %s487, 1
    %489 = vsyncpa [#allocation4], 1
    %s490 = scalar_lea.sflag [#allocation4], 1
    %491 = vsyncpa %s490, 1

</llo_original>
